<compile_context>
chip_gen: v5e
topology: v5e:2x2
jax: 0.10.0
libtpu: 0.0.40
codegen_flags: <defaults>
</compile_context>

<pallas_src>
import math
import functools

import jax
import jax.numpy as jnp
from jax import lax
from jax.experimental import pallas as pl
from jax.experimental.pallas import tpu as pltpu

_LANE = 128
_SUBLANE = 16  # safe sublane multiple for bf16/f32 second-to-last dims


def _round_up(x, n):
    return ((x + n - 1) // n) * n


def _cdiv(a, b):
    return (a + b - 1) // b


@functools.lru_cache(maxsize=None)
def _hw_defaults():
    """Pick token-tile / hidden-chunk / VMEM budget per TPU generation."""
    try:
        vmem = int(pltpu.get_tpu_info().vmem_capacity_bytes)
    except Exception:  # conservative fallback (valid on every generation)
        vmem = 64 << 20
    if vmem >= (100 << 20):          # v5e / v6e: 128 MiB VMEM
        return {"tm": 768, "th": 512, "vmem_budget": vmem - (16 << 20)}
    # v7x-class: 64 MiB physical VMEM -> smaller token tile + real headroom
    return {"tm": 384, "th": 512, "vmem_budget": max(vmem - (12 << 20), 32 << 20)}


# ----------------------------------------------------------------------------
# Kernel
# ----------------------------------------------------------------------------
def _mlp_kernel(x_ref, w1_ref, b1_ref, w2_ref, b2_ref, o_ref, acc_ref):
    """One (TM, out) output tile; grid axis 1 reduces over hidden chunks."""
    j = pl.program_id(1)

    @pl.when(j == 0)
    def _init():
        acc_ref[...] = jnp.zeros_like(acc_ref)

    # fc1 chunk: (TM, in) @ (in, TH) with f32 accumulation on the MXU.
    h = jnp.dot(x_ref[...], w1_ref[...], preferred_element_type=jnp.float32)
    h = h + b1_ref[...].astype(jnp.float32)

    # Exact (erf) GELU in f32, matching torch.nn.GELU default.
    h = 0.5 * h * (1.0 + lax.erf(h * (1.0 / math.sqrt(2.0))))
    # dropout(p=0.0) is the identity -> nothing to do.

    # fc2 partial product; cast h to the weight (compute) dtype so the MXU
    # runs its native low-precision path, still accumulating in f32.
    acc_ref[...] += jnp.dot(h.astype(w2_ref.dtype), w2_ref[...],
                            preferred_element_type=jnp.float32)

    @pl.when(j == pl.num_programs(1) - 1)
    def _finalize():
        o_ref[...] = (acc_ref[...]
                      + b2_ref[...].astype(jnp.float32)).astype(o_ref.dtype)


# ----------------------------------------------------------------------------
# Parameter preparation (done ONCE, outside the per-call path)
# ----------------------------------------------------------------------------
def prepare_mlp_params(w1, b1, w2, b2, *, compute_dtype=jnp.bfloat16, th=None):
    """Zero-pad feature dims to lane-dense multiples of 128, pick the hidden
    chunk size, and cast to the MXU compute dtype.  Call once at init."""
    in_features, hidden = w1.shape
    out_features = w2.shape[1]
    if th is None:
        th = _hw_defaults()["th"]

    in_p = _round_up(in_features, _LANE)
    out_p = _round_up(out_features, _LANE)
    hid_p = _round_up(hidden, _LANE)

    th = _round_up(min(th, hid_p), _LANE)
    n_h = _cdiv(hid_p, th)
    th_eff = _round_up(_cdiv(hid_p, n_h), _LANE)   # never inflate by a full chunk
    hid_pad = n_h * th_eff

    w1p = jnp.pad(w1, ((0, in_p - in_features), (0, hid_pad - hidden))).astype(compute_dtype)
    b1p = jnp.pad(b1, (0, hid_pad - hidden)).astype(compute_dtype).reshape(1, hid_pad)
    w2p = jnp.pad(w2, ((0, hid_pad - hidden), (0, out_p - out_features))).astype(compute_dtype)
    b2p = jnp.pad(b2, (0, out_p - out_features)).astype(compute_dtype).reshape(1, out_p)

    return {"w1": w1p, "b1": b1p, "w2": w2p, "b2": b2p,
            "out_features": out_features, "th_eff": th_eff}


# ----------------------------------------------------------------------------
# Jitted core (only pads x; all geometry is static at trace time)
# ----------------------------------------------------------------------------
@functools.partial(jax.jit,
                   static_argnames=("out_features", "th_eff", "tm", "vmem_budget"))
def _mlp_core(x, w1p, b1p, w2p, b2p, *, out_features, th_eff, tm, vmem_budget):
    in_features = x.shape[-1]
    lead = x.shape[:-1]
    m = int(math.prod(lead)) if lead else 1

    in_p, hid_pad = w1p.shape
    out_p = w2p.shape[1]
    n_h = hid_pad // th_eff

    cdt = w1p.dtype
    cdt_bytes = jnp.dtype(cdt).itemsize
    out_dtype = x.dtype
    out_bytes = jnp.dtype(out_dtype).itemsize

    # ---- token tile ---------------------------------------------------------
    tm_eff = _round_up(min(tm, _round_up(m, _SUBLANE)), _SUBLANE)
    if _cdiv(m, tm_eff) == 1 and m > 256:
        # split so the "parallel" axis has >=2 tiles (both v7x TCs busy)
        tm_eff = _round_up(_cdiv(m, 2), _LANE)

    def _vmem_needed(t):
        return (2 * t * in_p * cdt_bytes          # double-buffered x tile
                + 2 * in_p * th_eff * cdt_bytes   # double-buffered w1 chunk
                + 2 * th_eff * out_p * cdt_bytes  # double-buffered w2 chunk
                + 2 * (th_eff + out_p) * cdt_bytes  # biases
                + 2 * t * out_p * out_bytes       # double-buffered out tile
                + t * out_p * 4                   # f32 accumulator scratch
                + t * th_eff * 4)                 # f32 h intermediate

    # shrink the token tile until the request fits the per-generation budget
    while _vmem_needed(tm_eff) > vmem_budget and tm_eff > _SUBLANE:
        tm_eff = max(_SUBLANE, _round_up(tm_eff // 2, _SUBLANE))

    m_p = _round_up(m, tm_eff)
    n_m = m_p // tm_eff

    # ---- only x is padded/cast per call -------------------------------------
    x2d = x.reshape(m, in_features).astype(cdt)
    if m_p != m or in_p != in_features:
        x2d = jnp.pad(x2d, ((0, m_p - m), (0, in_p - in_features)))

    vmem_limit = int(min(max(_vmem_needed(tm_eff) + (8 << 20), 32 << 20),
                         vmem_budget))

    flops = 2 * m_p * in_p * hid_pad + 2 * m_p * hid_pad * out_p
    bytes_accessed = int(
        m_p * in_p * cdt_bytes + m_p * out_p * out_bytes
        + n_m * (in_p * hid_pad + hid_pad * out_p + hid_pad + out_p) * cdt_bytes)
    cost = pl.CostEstimate(flops=int(flops),
                           transcendentals=int(m_p * hid_pad),
                           bytes_accessed=bytes_accessed)

    out2d = pl.pallas_call(
        _mlp_kernel,
        out_shape=jax.ShapeDtypeStruct((m_p, out_p), out_dtype),
        grid_spec=pltpu.PrefetchScalarGridSpec(
            num_scalar_prefetch=0,
            grid=(n_m, n_h),
            in_specs=[
                pl.BlockSpec((tm_eff, in_p), lambda i, j: (i, 0)),   # x tile
                pl.BlockSpec((in_p, th_eff), lambda i, j: (0, j)),   # w1 chunk
                pl.BlockSpec((1, th_eff),    lambda i, j: (0, j)),   # b1 chunk
                pl.BlockSpec((th_eff, out_p), lambda i, j: (j, 0)),  # w2 chunk
                pl.BlockSpec((1, out_p),     lambda i, j: (0, 0)),   # b2
            ],
            out_specs=pl.BlockSpec((tm_eff, out_p), lambda i, j: (i, 0)),
            scratch_shapes=[pltpu.VMEM((tm_eff, out_p), jnp.float32)],
        ),
        compiler_params=pltpu.CompilerParams(
            dimension_semantics=("parallel", "arbitrary"),
            vmem_limit_bytes=vmem_limit,
        ),
        cost_estimate=cost,
    )(x2d, w1p, b1p, w2p, b2p)

    out2d = out2d[:m, :out_features]
    return out2d.reshape(*lead, out_features)


def mlp_apply(x, params, *, tm=None, vmem_budget=None):
    """Forward pass with pre-prepared (padded / cast) parameters."""
    hw = _hw_defaults()
    return _mlp_core(x, params["w1"], params["b1"], params["w2"], params["b2"],
                     out_features=int(params["out_features"]),
                     th_eff=int(params["th_eff"]),
                     tm=int(tm if tm is not None else hw["tm"]),
                     vmem_budget=int(vmem_budget if vmem_budget is not None
                                     else hw["vmem_budget"]))


def mlp_forward(x, w1, b1, w2, b2, *, compute_dtype=jnp.bfloat16, tm=None, th=None):
    """Convenience wrapper: prepares params then applies.  For repeated calls
    with the same weights, call prepare_mlp_params() once and use mlp_apply()."""
    params = prepare_mlp_params(w1, b1, w2, b2, compute_dtype=compute_dtype, th=th)
    return mlp_apply(x, params, tm=tm)


# ----------------------------------------------------------------------------
# Reference + init helpers
# ----------------------------------------------------------------------------
def init_mlp_params(key, in_features, hidden_features=None, out_features=None,
                    dtype=jnp.float32):
    """Synthetic init mirroring nn.Linear shapes; weights stored as (in, out)."""
    out_features = out_features or in_features
    hidden_features = hidden_features or in_features
    k1, k2, k3, k4 = jax.random.split(key, 4)
    bound1 = 1.0 / math.sqrt(in_features)
    bound2 = 1.0 / math.sqrt(hidden_features)
    w1 = jax.random.uniform(k1, (in_features, hidden_features), dtype,
                            minval=-bound1, maxval=bound1)
    b1 = jax.random.uniform(k2, (hidden_features,), dtype,
                            minval=-bound1, maxval=bound1)
    w2 = jax.random.uniform(k3, (hidden_features, out_features), dtype,
                            minval=-bound2, maxval=bound2)
    b2 = jax.random.uniform(k4, (out_features,), dtype,
                            minval=-bound2, maxval=bound2)
    return w1, b1, w2, b2


def mlp_reference(x, w1, b1, w2, b2, compute_dtype=None):
    """Pure-JAX reference.  With compute_dtype set it mirrors the kernel's
    numerics (bf16-rounded operands, f32 accumulation); with None it is the
    exact f32 torch-parity forward."""
    def c(a):
        a = a.astype(compute_dtype) if compute_dtype is not None else a
        return a.astype(jnp.float32)
    hi = lax.Precision.HIGHEST
    h = jnp.dot(c(x), c(w1), precision=hi) + c(b1)
    h = 0.5 * h * (1.0 + lax.erf(h / math.sqrt(2.0)))
    if compute_dtype is not None:
        h = h.astype(compute_dtype).astype(jnp.float32)
    y = jnp.dot(h, c(w2), precision=hi) + c(b2)
    return y.astype(x.dtype)


if __name__ == "__main__":
    key = jax.random.PRNGKey(0)
    kx, kp, kx2, kp2 = jax.random.split(key, 4)

    # ---- test 1: small module shapes, default bf16 MXU path ----------------
    batch, seq, in_features, hidden = 2, 8, 16, 32
    x = jax.random.normal(kx, (batch, seq, in_features), jnp.float32)
    w1, b1, w2, b2 = init_mlp_params(kp, in_features, hidden_features=hidden)
    params = prepare_mlp_params(w1, b1, w2, b2)            # pad + cast once
    out = jax.block_until_ready(mlp_apply(x, params))
    ref = mlp_reference(x, w1, b1, w2, b2, compute_dtype=jnp.bfloat16)
    assert out.shape == (batch, seq, in_features), out.shape
    assert jnp.allclose(out, ref, atol=2e-3, rtol=2e-3), "mismatch (test 1)"

    # ---- test 2: ragged dims, multi M tile + hidden-chunk reduction --------
    b2_, s2_, in2, hid2, out2 = 2, 136, 72, 700, 56
    x_b = jax.random.normal(kx2, (b2_, s2_, in2), jnp.float32)
    pw1, pb1, pw2, pb2 = init_mlp_params(kp2, in2, hidden_features=hid2,
                                         out_features=out2)
    params_b = prepare_mlp_params(pw1, pb1, pw2, pb2)
    out_b = jax.block_until_ready(mlp_apply(x_b, params_b))
    ref_b = mlp_reference(x_b, pw1, pb1, pw2, pb2, compute_dtype=jnp.bfloat16)
    assert out_b.shape == (b2_, s2_, out2), out_b.shape
    assert jnp.allclose(out_b, ref_b, atol=3e-3, rtol=3e-3), "mismatch (test 2)"

    # ---- test 3: exact f32 parity path vs torch-style f32 reference --------
    out_f32 = jax.block_until_ready(
        mlp_forward(x, w1, b1, w2, b2, compute_dtype=jnp.float32))
    ref_f32 = mlp_reference(x, w1, b1, w2, b2)
    assert jnp.allclose(out_f32, ref_f32, atol=1e-4, rtol=1e-4), "mismatch (test 3)"

    print("KERNEL_OK")
</pallas_src>

<mosaic_0001>
module attributes {stable_mosaic.version = 11 : i64} {
  func.func @_mlp_kernel(%arg0: i32, %arg1: i32, %arg2: memref<16x128xbf16, #tpu.memory_space<vmem>>, %arg3: memref<128x128xbf16, #tpu.memory_space<vmem>>, %arg4: memref<1x128xbf16, #tpu.memory_space<vmem>>, %arg5: memref<128x128xbf16, #tpu.memory_space<vmem>>, %arg6: memref<1x128xbf16, #tpu.memory_space<vmem>>, %arg7: memref<16x128xf32, #tpu.memory_space<vmem>>, %arg8: memref<16x128xf32, #tpu.memory_space<vmem>>) attributes {dimension_semantics = [#tpu.dimension_semantics<parallel>, #tpu.dimension_semantics<arbitrary>], iteration_bounds = array<i64: 1, 1>, scalar_prefetch = 0 : i64, scratch_operands = 1 : i64, tpu.core_type = #tpu.core_type<tc>, window_params = [{transform_indices = @transform_0, window_bounds = array<i64: 16, 128>}, {transform_indices = @transform_1, window_bounds = array<i64: 128, 128>}, {transform_indices = @transform_2, window_bounds = array<i64: 1, 128>}, {transform_indices = @transform_3, window_bounds = array<i64: 128, 128>}, {pipeline_mode = #tpu.pipeline_mode<synchronous>, transform_indices = @transform_4, window_bounds = array<i64: 1, 128>}, {transform_indices = @transform_5, window_bounds = array<i64: 16, 128>}]} {
    %c0_i32 = arith.constant 0 : i32
    %0 = arith.cmpi eq, %arg1, %c0_i32 : i32
    %1 = arith.extui %0 : i1 to i32
    %c0_i32_0 = arith.constant 0 : i32
    %2 = arith.cmpi ne, %1, %c0_i32_0 : i32
    scf.if %2 {
      %cst_18 = arith.constant 0.000000e+00 : f32
      %27 = vector.broadcast %cst_18 : f32 to vector<16x128xf32>
      %c0_19 = arith.constant 0 : index
      %c0_20 = arith.constant 0 : index
      %28 = vector.load %arg8[%c0_19, %c0_20] : memref<16x128xf32, #tpu.memory_space<vmem>>, vector<16x128xf32>
      tpu.vector_store %arg8[%c0_19, %c0_20], %27 {strides = array<i32>} : memref<16x128xf32, #tpu.memory_space<vmem>>, vector<16x128xf32>,
    } else {
    }
    %c0 = arith.constant 0 : index
    %c0_1 = arith.constant 0 : index
    %3 = vector.load %arg2[%c0, %c0_1] : memref<16x128xbf16, #tpu.memory_space<vmem>>, vector<16x128xbf16>
    %c0_2 = arith.constant 0 : index
    %c0_3 = arith.constant 0 : index
    %4 = vector.load %arg3[%c0_2, %c0_3] : memref<128x128xbf16, #tpu.memory_space<vmem>>, vector<128x128xbf16>
    %cst = arith.constant dense<0.000000e+00> : vector<16x128xf32>
    %5 = tpu.matmul %3, %4, %cst {dimension_numbers = #tpu.dot_dimension_numbers<[1], [0], [0], [1], [0, 0, 1, 1], [], []>} : vector<16x128xbf16>, vector<128x128xbf16>, vector<16x128xf32> -> vector<16x128xf32>
    %c0_4 = arith.constant 0 : index
    %c0_5 = arith.constant 0 : index
    %6 = vector.load %arg4[%c0_4, %c0_5] : memref<1x128xbf16, #tpu.memory_space<vmem>>, vector<1x128xbf16>
    %7 = arith.extf %6 : vector<1x128xbf16> to vector<1x128xf32>
    %8 = vector.broadcast %7 : vector<1x128xf32> to vector<16x128xf32>
    %9 = arith.addf %5, %8 : vector<16x128xf32>
    %cst_6 = arith.constant 5.000000e-01 : f32
    %10 = vector.broadcast %cst_6 : f32 to vector<16x128xf32>
    %11 = arith.mulf %10, %9 : vector<16x128xf32>
    %cst_7 = arith.constant 0.707106769 : f32
    %12 = vector.broadcast %cst_7 : f32 to vector<16x128xf32>
    %13 = arith.mulf %9, %12 : vector<16x128xf32>
    %14 = math.erf %13 : vector<16x128xf32>
    %cst_8 = arith.constant 1.000000e+00 : f32
    %15 = vector.broadcast %cst_8 : f32 to vector<16x128xf32>
    %16 = arith.addf %15, %14 : vector<16x128xf32>
    %17 = arith.mulf %11, %16 : vector<16x128xf32>
    %c0_9 = arith.constant 0 : index
    %c0_10 = arith.constant 0 : index
    %18 = vector.load %arg8[%c0_9, %c0_10] : memref<16x128xf32, #tpu.memory_space<vmem>>, vector<16x128xf32>
    %19 = arith.truncf %17 : vector<16x128xf32> to vector<16x128xbf16>
    %c0_11 = arith.constant 0 : index
    %c0_12 = arith.constant 0 : index
    %20 = vector.load %arg5[%c0_11, %c0_12] : memref<128x128xbf16, #tpu.memory_space<vmem>>, vector<128x128xbf16>
    %cst_13 = arith.constant dense<0.000000e+00> : vector<16x128xf32>
    %21 = tpu.matmul %19, %20, %cst_13 {dimension_numbers = #tpu.dot_dimension_numbers<[1], [0], [0], [1], [0, 0, 1, 1], [], []>} : vector<16x128xbf16>, vector<128x128xbf16>, vector<16x128xf32> -> vector<16x128xf32>
    %22 = arith.addf %18, %21 : vector<16x128xf32>
    %c0_14 = arith.constant 0 : index
    %c0_15 = arith.constant 0 : index
    %23 = vector.load %arg8[%c0_14, %c0_15] : memref<16x128xf32, #tpu.memory_space<vmem>>, vector<16x128xf32>
    tpu.vector_store %arg8[%c0_14, %c0_15], %22 {strides = array<i32>} : memref<16x128xf32, #tpu.memory_space<vmem>>, vector<16x128xf32>,
    %c0_i32_16 = arith.constant 0 : i32
    %24 = arith.cmpi eq, %arg1, %c0_i32_16 : i32
    %25 = arith.extui %24 : i1 to i32
    %c0_i32_17 = arith.constant 0 : i32
    %26 = arith.cmpi ne, %25, %c0_i32_17 : i32
    scf.if %26 {
      %c0_18 = arith.constant 0 : index
      %c0_19 = arith.constant 0 : index
      %27 = vector.load %arg8[%c0_18, %c0_19] : memref<16x128xf32, #tpu.memory_space<vmem>>, vector<16x128xf32>
      %c0_20 = arith.constant 0 : index
      %c0_21 = arith.constant 0 : index
      %28 = vector.load %arg6[%c0_20, %c0_21] : memref<1x128xbf16, #tpu.memory_space<vmem>>, vector<1x128xbf16>
      %29 = arith.extf %28 : vector<1x128xbf16> to vector<1x128xf32>
      %30 = vector.broadcast %29 : vector<1x128xf32> to vector<16x128xf32>
      %31 = arith.addf %27, %30 : vector<16x128xf32>
      %c0_22 = arith.constant 0 : index
      %c0_23 = arith.constant 0 : index
      %32 = vector.load %arg7[%c0_22, %c0_23] : memref<16x128xf32, #tpu.memory_space<vmem>>, vector<16x128xf32>
      tpu.vector_store %arg7[%c0_22, %c0_23], %31 {strides = array<i32>} : memref<16x128xf32, #tpu.memory_space<vmem>>, vector<16x128xf32>,
    } else {
    }
    return
  }
  func.func @transform_0(%arg0: i32, %arg1: i32) -> (i32, i32) {
    %c0_i32 = arith.constant 0 : i32
    %c0_i32_0 = arith.constant 0 : i32
    return %arg0, %c0_i32 : i32, i32
  }
  func.func @transform_1(%arg0: i32, %arg1: i32) -> (i32, i32) {
    %c0_i32 = arith.constant 0 : i32
    %c0_i32_0 = arith.constant 0 : i32
    return %c0_i32, %arg1 : i32, i32
  }
  func.func @transform_2(%arg0: i32, %arg1: i32) -> (i32, i32) {
    %c0_i32 = arith.constant 0 : i32
    %c0_i32_0 = arith.constant 0 : i32
    return %c0_i32, %arg1 : i32, i32
  }
  func.func @transform_3(%arg0: i32, %arg1: i32) -> (i32, i32) {
    %c0_i32 = arith.constant 0 : i32
    %c0_i32_0 = arith.constant 0 : i32
    return %arg1, %c0_i32 : i32, i32
  }
  func.func @transform_4(%arg0: i32, %arg1: i32) -> (i32, i32) {
    %c0_i32 = arith.constant 0 : i32
    %c0_i32_0 = arith.constant 0 : i32
    %c0_i32_1 = arith.constant 0 : i32
    return %c0_i32, %c0_i32_0 : i32, i32
  }
  func.func @transform_5(%arg0: i32, %arg1: i32) -> (i32, i32) {
    %c0_i32 = arith.constant 0 : i32
    %c0_i32_0 = arith.constant 0 : i32
    return %arg0, %c0_i32 : i32, i32
  }
}

</mosaic_0001>

<llo_original>
// kernel: _mlp_core.1
$region0: #{_mlp_core.1}
  #allocation0 [shape = 'u32[]', space=smem, size = 0x4, offset = 0x4, fixed_abs, tag = 'smem constant byte address 0x4 - core index']
  #allocation1 [shape = 'u32[72,128]{1,0:T(1,128)}', space=vmem, size = 0x9000, scoped, tag = 'internal scratch']
  #allocation2 [shape = 'f32[16,128]{1,0:T(8,128)}', space=vmem, size = 0x2000, scoped, tag = 'scratch operand']
  %s0 = inlined_call_operand.vmem [shape: bf16[16,128], index: 0, kind: input, shape index: {}]
  %s1 = inlined_call_operand.hbm [shape: bf16[128,128], index: 1, kind: input, shape index: {}]
  %s2 = inlined_call_operand.vmem [shape: bf16[1,128], index: 2, kind: input, shape index: {}]
  %s3 = inlined_call_operand.hbm [shape: bf16[128,128], index: 3, kind: input, shape index: {}]
  %s4 = inlined_call_operand.vmem [shape: bf16[1,128], index: 4, kind: input, shape index: {}]
  %s5 = inlined_call_operand.vmem [shape: f32[16,128], index: 5, kind: output, shape index: {}]
  %s6 = sld [smem:[#allocation0]]
  $region46: #{_mlp_core.1} parent=0
    _
  %s8 = ssub.s32 1, %s6
  %s9 = scalar_select 0, %s8, %s6
  $region1: #{_mlp_core.1} parent=0
    #allocation3 [shape = 'u8[32768]{0}', space=vmem, size = 0x8000, scoped, tag = 'input window, operand 1, single buffered']
    #allocation4 [shape = 's32[1]{0}', space=sflag, size = 0x4, scoped, tag = 'scoped memory for _mlp_core.1']
    #allocation5 [shape = 'u8[32768]{0}', space=vmem, size = 0x8000, scoped, tag = 'input window, operand 3, single buffered']
    #allocation6 [shape = 's32[1]{0}', space=sflag, size = 0x4, scoped, tag = 'scoped memory for _mlp_core.1']
    %10 = vsyncpa [#allocation4], 0
    %11 = vsyncpa [#allocation6], 0
    // Predicated region
    $region2: #{_mlp_core.1} parent=1 // pred_check
      _
    $region3: #{_mlp_core.1} parent=1 // pred_check_branch
      %13 = sbr.rel (0) target = $region5
    $region4: #{_mlp_core.1} parent=1 // pred_region
      _
    $region5: #{_mlp_core.1} parent=1 // pred_fallthru
      _
    // Predicated region
    $region6: #{_mlp_core.1} parent=1 // pred_check
      _
    $region7: #{_mlp_core.1} parent=1 // pred_check_branch
      %15 = sbr.rel (0) target = $region9
    $region8: #{_mlp_core.1} parent=1 // pred_region
      %17 = vsyncadd [#allocation4], 0
      %s18 = sshll.u32 %s1, 4
      %s19 = int_to_ptr.hbm [resolvable:$true] %s18
      %s20 = sshll.u32 [#allocation3], 4
      %s21 = int_to_ptr.vmem [resolvable:$true] %s20
      %26 = dma.hbm_to_vmem [thread:$0]  %s19, 1024, %s21, [#allocation4], 64, 64, 4
    $region9: #{_mlp_core.1} parent=1 // pred_fallthru
      _
    // Predicated region
    $region10: #{_mlp_core.1} parent=1 // pred_check
      _
    $region11: #{_mlp_core.1} parent=1 // pred_check_branch
      %28 = sbr.rel (0) target = $region13
    $region12: #{_mlp_core.1} parent=1 // pred_region
      _
    $region13: #{_mlp_core.1} parent=1 // pred_fallthru
      _
    // Predicated region
    $region14: #{_mlp_core.1} parent=1 // pred_check
      _
    $region15: #{_mlp_core.1} parent=1 // pred_check_branch
      %30 = sbr.rel (0) target = $region17
    $region16: #{_mlp_core.1} parent=1 // pred_region
      %32 = vsyncadd [#allocation6], 0
      %s33 = sshll.u32 %s3, 4
      %s34 = int_to_ptr.hbm [resolvable:$true] %s33
      %s35 = sshll.u32 [#allocation5], 4
      %s36 = int_to_ptr.vmem [resolvable:$true] %s35
      %41 = dma.hbm_to_vmem [thread:$0]  %s34, 1024, %s36, [#allocation6], 64, 64, 4
    $region17: #{_mlp_core.1} parent=1 // pred_fallthru
      _
    // Predicated region
    $region18: #{_mlp_core.1} parent=1 // pred_check
      _
    $region19: #{_mlp_core.1} parent=1 // pred_check_branch
      %43 = sbr.rel (0) target = $region21
    $region20: #{_mlp_core.1} parent=1 // pred_region
      _
    $region21: #{_mlp_core.1} parent=1 // pred_fallthru
      _
    // Predicated region
    $region22: #{_mlp_core.1} parent=1 // pred_check
      _
    $region23: #{_mlp_core.1} parent=1 // pred_check_branch
      %45 = sbr.rel (0) target = $region25
    $region24: #{_mlp_core.1} parent=1 // pred_region
      %47 = dma.done [#allocation4], 1024
    $region25: #{_mlp_core.1} parent=1 // pred_fallthru
      _
    // Predicated region
    $region26: #{_mlp_core.1} parent=1 // pred_check
      _
    $region27: #{_mlp_core.1} parent=1 // pred_check_branch
      %49 = sbr.rel (0) target = $region29
    $region28: #{_mlp_core.1} parent=1 // pred_region
      %51 = dma.done [#allocation6], 1024
    $region29: #{_mlp_core.1} parent=1 // pred_fallthru
      _
    %p52 = scmp.eq.s32.totalorder 0, 0
    // Predicated region
    $region30: #{_mlp_core.1} parent=1 // pred_check
      %p53 = pneg %p52
    $region31: #{_mlp_core.1} parent=1 // pred_check_branch
      %55 = sbr.rel (%p53) target = $region33
    $region32: #{_mlp_core.1} parent=1 // pred_region
      %56 = vst [vmem:[#allocation2] sm:$0xff] 0.0
      %57 = vst [vmem:[#allocation2 + $0x8] sm:$0xff] 0.0
    $region33: #{_mlp_core.1} parent=1 // pred_fallthru
      _
    %v58 = vld [vmem:[%s0] sm:$0xf]
    %v59 = vld [vmem:[%s0 + $0x4] sm:$0xf]
    %v60 = vld [vmem:[#allocation3] sm:$0xf]
    %v61 = vld [vmem:[#allocation3 + $0x4] sm:$0xf]
    %v62 = vld [vmem:[#allocation3 + $0x8] sm:$0xf]
    %v63 = vld [vmem:[#allocation3 + $0xc] sm:$0xf]
    %v64 = vld [vmem:[#allocation3 + $0x10] sm:$0xf]
    %v65 = vld [vmem:[#allocation3 + $0x14] sm:$0xf]
    %v66 = vld [vmem:[#allocation3 + $0x18] sm:$0xf]
    %v67 = vld [vmem:[#allocation3 + $0x1c] sm:$0xf]
    %v68 = vld [vmem:[#allocation3 + $0x20] sm:$0xf]
    %v69 = vld [vmem:[#allocation3 + $0x24] sm:$0xf]
    %v70 = vld [vmem:[#allocation3 + $0x28] sm:$0xf]
    %v71 = vld [vmem:[#allocation3 + $0x2c] sm:$0xf]
    %v72 = vld [vmem:[#allocation3 + $0x30] sm:$0xf]
    %v73 = vld [vmem:[#allocation3 + $0x34] sm:$0xf]
    %v74 = vld [vmem:[#allocation3 + $0x38] sm:$0xf]
    %v75 = vld [vmem:[#allocation3 + $0x3c] sm:$0xf]
    %v76 = vld [vmem:[%s2] sm:$0x1]
    %v77 = vunpack.c.l.bf16 %v76
    %v78 = vperm.slane %v77, 0
    %v81 = vunpack.c.l.b16 %v58
    %v82 = vunpack.c.l.b16 %v59
    %v83 = vpack.c.b16 %v82, %v81
    %v101 = vunpack.c.l.b16 %v60
    %v102 = vunpack.c.l.b16 %v61
    %v103 = vunpack.c.l.b16 %v62
    %v104 = vunpack.c.l.b16 %v63
    %v105 = vunpack.c.l.b16 %v64
    %v106 = vunpack.c.l.b16 %v65
    %v107 = vunpack.c.l.b16 %v66
    %v108 = vunpack.c.l.b16 %v67
    %v109 = vunpack.c.l.b16 %v68
    %v110 = vunpack.c.l.b16 %v69
    %v111 = vunpack.c.l.b16 %v70
    %v112 = vunpack.c.l.b16 %v71
    %v113 = vunpack.c.l.b16 %v72
    %v114 = vunpack.c.l.b16 %v73
    %v115 = vunpack.c.l.b16 %v74
    %v116 = vunpack.c.l.b16 %v75
    %v117 = vpack.c.b16 %v102, %v101
    %v118 = vpack.c.b16 %v104, %v103
    %v119 = vpack.c.b16 %v106, %v105
    %v120 = vpack.c.b16 %v108, %v107
    %v121 = vpack.c.b16 %v110, %v109
    %v122 = vpack.c.b16 %v112, %v111
    %v123 = vpack.c.b16 %v114, %v113
    %v124 = vpack.c.b16 %v116, %v115
    %133 = vmatpush.bf16.msra.mxu0 %v124
    %134 = vmatpush.bf16.msra.mxu0 %v123
    %135 = vmatpush.bf16.msra.mxu0 %v122
    %136 = vmatpush.bf16.msra.mxu0 %v121
    %137 = vmatpush.bf16.msra.mxu0 %v120
    %138 = vmatpush.bf16.msra.mxu0 %v119
    %139 = vmatpush.bf16.msra.mxu0 %v118
    %140 = vmatpush.bf16.msra.mxu0 %v117
    %141 = vmatmul.bf16.gmra.mxu0 %v83
    %v142 = vpop.f32.mrf.mxu0
    %v143 = vadd.f32 %v78, %v142
    %v144 = vpop.f32.mrf.mxu0
    %v145 = vadd.f32 %v78, %v144
    %146 = vdwg.mxu0
    %v147 = vmul.f32 %v143, 0.5
    %v148 = vmul.f32 %v145, 0.5
    %v149 = vmul.f32 %v143, 0.70710677
    %v150 = vmul.f32 %v145, 0.70710677
    %v151 = vmul.f32 %v149, %v149
    %v152 = vmin.f32 16.0, %v151
    %v153 = vmul.f32 %v152, 2.1237322e-06
    %v154 = vadd.f32 %v153, 0.00028619796
    %v155 = vmul.f32 %v152, %v154
    %v156 = vadd.f32 %v155, 0.0036580483
    %v157 = vmul.f32 %v152, %v156
    %v158 = vadd.f32 %v157, 0.05243302
    %v159 = vmul.f32 %v152, %v158
    %v160 = vadd.f32 %v159, 0.18741608
    %v161 = vmul.f32 %v152, %v160
    %v162 = vadd.f32 %v161, 1.1283791
    %v163 = vmul.f32 %v149, %v162
    %v164 = vmul.f32 %v152, 3.8918573e-05
    %v165 = vadd.f32 %v164, 0.001143296
    %v166 = vmul.f32 %v152, %v165
    %v167 = vadd.f32 %v166, 0.014752088
    %v168 = vmul.f32 %v152, %v167
    %v169 = vadd.f32 %v168, 0.112945676
    %v170 = vmul.f32 %v152, %v169
    %v171 = vadd.f32 %v170, 0.4994258
    %v172 = vmul.f32 %v152, %v171
    %v173 = vadd.f32 %v172, 1.0
    %v174 = vrcp.pop %v173
    %v175 = vmul.f32 %v173, %v174
    %v176 = vsub.f32 1.0, %v175
    %v177 = vmul.f32 %v174, %v176
    %v178 = vadd.f32 %v174, %v177
    %vm179 = vweird.f32 %v173
    %vm180 = vweird.f32 %v174
    %vm181 = vmor %vm179, %vm180
    %v182 = vsel %vm181, %v174, %v178
    %v183 = vand.u32 2147483647, %v173
    %vm184 = vcmp.eq.f32.partialorder %v183, 8.507059e+37
    %v185 = vand.u32 %v173, 2147483648
    %v186 = vor.u32 1.1754944e-38, %v185
    %v187 = vsel %vm184, %v186, %v182
    %v188 = vmul.f32 %v163, %v187
    %v189 = vmin.f32 %v188, 1.0
    %v190 = vmax.f32 %v189, -1.0
    %v191 = vmul.f32 %v150, %v150
    %v192 = vmin.f32 16.0, %v191
    %v193 = vmul.f32 %v192, 2.1237322e-06
    %v194 = vadd.f32 %v193, 0.00028619796
    %v195 = vmul.f32 %v192, %v194
    %v196 = vadd.f32 %v195, 0.0036580483
    %v197 = vmul.f32 %v192, %v196
    %v198 = vadd.f32 %v197, 0.05243302
    %v199 = vmul.f32 %v192, %v198
    %v200 = vadd.f32 %v199, 0.18741608
    %v201 = vmul.f32 %v192, %v200
    %v202 = vadd.f32 %v201, 1.1283791
    %v203 = vmul.f32 %v150, %v202
    %v204 = vmul.f32 %v192, 3.8918573e-05
    %v205 = vadd.f32 %v204, 0.001143296
    %v206 = vmul.f32 %v192, %v205
    %v207 = vadd.f32 %v206, 0.014752088
    %v208 = vmul.f32 %v192, %v207
    %v209 = vadd.f32 %v208, 0.112945676
    %v210 = vmul.f32 %v192, %v209
    %v211 = vadd.f32 %v210, 0.4994258
    %v212 = vmul.f32 %v192, %v211
    %v213 = vadd.f32 %v212, 1.0
    %v214 = vrcp.pop %v213
    %v215 = vmul.f32 %v213, %v214
    %v216 = vsub.f32 1.0, %v215
    %v217 = vmul.f32 %v214, %v216
    %v218 = vadd.f32 %v214, %v217
    %vm219 = vweird.f32 %v213
    %vm220 = vweird.f32 %v214
    %vm221 = vmor %vm219, %vm220
    %v222 = vsel %vm221, %v214, %v218
    %v223 = vand.u32 2147483647, %v213
    %vm224 = vcmp.eq.f32.partialorder %v223, 8.507059e+37
    %v225 = vand.u32 %v213, 2147483648
    %v226 = vor.u32 1.1754944e-38, %v225
    %v227 = vsel %vm224, %v226, %v222
    %v228 = vmul.f32 %v203, %v227
    %v229 = vmin.f32 %v228, 1.0
    %v230 = vmax.f32 %v229, -1.0
    %v231 = vadd.f32 %v190, 1.0
    %v232 = vadd.f32 %v230, 1.0
    %v233 = vmul.f32 %v147, %v231
    %v234 = vmul.f32 %v148, %v232
    %v235 = vld [vmem:[#allocation2] sm:$0xff]
    %v236 = vld [vmem:[#allocation2 + $0x8] sm:$0xff]
    %v237 = vpack.c.bf16 %v234, %v233
    %v238 = vld [vmem:[#allocation5] sm:$0xf]
    %v239 = vld [vmem:[#allocation5 + $0x4] sm:$0xf]
    %v240 = vld [vmem:[#allocation5 + $0x8] sm:$0xf]
    %v241 = vld [vmem:[#allocation5 + $0xc] sm:$0xf]
    %v242 = vld [vmem:[#allocation5 + $0x10] sm:$0xf]
    %v243 = vld [vmem:[#allocation5 + $0x14] sm:$0xf]
    %v244 = vld [vmem:[#allocation5 + $0x18] sm:$0xf]
    %v245 = vld [vmem:[#allocation5 + $0x1c] sm:$0xf]
    %v246 = vld [vmem:[#allocation5 + $0x20] sm:$0xf]
    %v247 = vld [vmem:[#allocation5 + $0x24] sm:$0xf]
    %v248 = vld [vmem:[#allocation5 + $0x28] sm:$0xf]
    %v249 = vld [vmem:[#allocation5 + $0x2c] sm:$0xf]
    %v250 = vld [vmem:[#allocation5 + $0x30] sm:$0xf]
    %v251 = vld [vmem:[#allocation5 + $0x34] sm:$0xf]
    %v252 = vld [vmem:[#allocation5 + $0x38] sm:$0xf]
    %v253 = vld [vmem:[#allocation5 + $0x3c] sm:$0xf]
    %v270 = vunpack.c.l.b16 %v238
    %v271 = vunpack.c.l.b16 %v239
    %v272 = vunpack.c.l.b16 %v240
    %v273 = vunpack.c.l.b16 %v241
    %v274 = vunpack.c.l.b16 %v242
    %v275 = vunpack.c.l.b16 %v243
    %v276 = vunpack.c.l.b16 %v244
    %v277 = vunpack.c.l.b16 %v245
    %v278 = vunpack.c.l.b16 %v246
    %v279 = vunpack.c.l.b16 %v247
    %v280 = vunpack.c.l.b16 %v248
    %v281 = vunpack.c.l.b16 %v249
    %v282 = vunpack.c.l.b16 %v250
    %v283 = vunpack.c.l.b16 %v251
    %v284 = vunpack.c.l.b16 %v252
    %v285 = vunpack.c.l.b16 %v253
    %v286 = vpack.c.b16 %v271, %v270
    %v287 = vpack.c.b16 %v273, %v272
    %v288 = vpack.c.b16 %v275, %v274
    %v289 = vpack.c.b16 %v277, %v276
    %v290 = vpack.c.b16 %v279, %v278
    %v291 = vpack.c.b16 %v281, %v280
    %v292 = vpack.c.b16 %v283, %v282
    %v293 = vpack.c.b16 %v285, %v284
    %302 = vmatpush.bf16.msra.mxu0 %v293
    %303 = vmatpush.bf16.msra.mxu0 %v292
    %304 = vmatpush.bf16.msra.mxu0 %v291
    %305 = vmatpush.bf16.msra.mxu0 %v290
    %306 = vmatpush.bf16.msra.mxu0 %v289
    %307 = vmatpush.bf16.msra.mxu0 %v288
    %308 = vmatpush.bf16.msra.mxu0 %v287
    %309 = vmatpush.bf16.msra.mxu0 %v286
    %310 = vmatmul.bf16.gmra.mxu0 %v237
    %v311 = vpop.f32.mrf.mxu0
    %v312 = vadd.f32 0.0, %v311
    %v313 = vpop.f32.mrf.mxu0
    %v314 = vadd.f32 0.0, %v313
    %315 = vdwg.mxu0
    %v316 = vadd.f32 %v235, %v312
    %v317 = vadd.f32 %v236, %v314
    %318 = vst [vmem:[#allocation2] sm:$0xff] %v316
    %319 = vst [vmem:[#allocation2 + $0x8] sm:$0xff] %v317
    // Predicated region
    $region34: #{_mlp_core.1} parent=1 // pred_check
      %p320 = pneg %p52
    $region35: #{_mlp_core.1} parent=1 // pred_check_branch
      %322 = sbr.rel (%p320) target = $region37
    $region36: #{_mlp_core.1} parent=1 // pred_region
      %v323 = vld [vmem:[#allocation2] sm:$0xff]
      %v324 = vld [vmem:[#allocation2 + $0x8] sm:$0xff]
      %v325 = vld [vmem:[%s4] sm:$0x1]
      %v326 = vunpack.c.l.bf16 %v325
      %v327 = vperm.slane %v326, 0
      %v328 = vadd.f32 %v323, %v327
      %v329 = vadd.f32 %v324, %v327
      %330 = vst [vmem:[%s5] sm:$0xff] %v328
      %331 = vst [vmem:[%s5 + $0x8] sm:$0xff] %v329
    $region37: #{_mlp_core.1} parent=1 // pred_fallthru
      _
    // Predicated region
    $region38: #{_mlp_core.1} parent=1 // pred_check
      _
    $region39: #{_mlp_core.1} parent=1 // pred_check_branch
      %333 = sbr.rel (0) target = $region41
    $region40: #{_mlp_core.1} parent=1 // pred_region
      _
    $region41: #{_mlp_core.1} parent=1 // pred_fallthru
      _
    // Predicated region
    $region42: #{_mlp_core.1} parent=1 // pred_check
      _
    $region43: #{_mlp_core.1} parent=1 // pred_check_branch
      %335 = sbr.rel (0) target = $region45
    $region44: #{_mlp_core.1} parent=1 // pred_region
      _
    $region45: #{_mlp_core.1} parent=1 // pred_fallthru
      _
    %336 = vsyncpa [#allocation4], 1
    %337 = vsyncpa [#allocation6], 1

</llo_original>
